<compile_context>
chip_gen: v7x
topology: tpu7x:2x2x1
jax: 0.10.0
libtpu: 0.0.40
codegen_flags: <defaults>
</compile_context>

<pallas_src>
import numpy as np
import jax
import jax.numpy as jnp
from jax.experimental import pallas as pl
from jax.experimental.pallas import tpu as pltpu

NEG_SLOPE = 0.01          # nn.LeakyReLU() default
LANE = 128                # padded lane width for the hidden layers


def _round_up(n, m):
    return ((n + m - 1) // m) * m


def _leaky_relu_f32(x):
    return jnp.maximum(x, NEG_SLOPE * x)


# ----------------------------------------------------------------------------
# Pallas kernel: whole discriminator forward for one batch tile.
# ----------------------------------------------------------------------------
def discriminator_kernel(x_ref,
                         w1_ref, b1_ref,
                         w2_ref, b2_ref,
                         w3_ref, b3_ref,
                         wf1_ref, bf1_ref,
                         wf2_ref,              # (8, 128) bf16, row 0 real
                         bf2_ref,              # (1,) f32 scalar in SMEM
                         o_ref):               # (1, TB) f32
    def layer(h_bf16, w_ref, b_ref):
        # bf16 MXU inputs, f32 accumulation; single truncation, bf16 epilogue.
        y = jnp.dot(h_bf16, w_ref[...], preferred_element_type=jnp.float32)
        z = y.astype(jnp.bfloat16) + b_ref[...]          # bf16 bias row (1,128)
        return jnp.maximum(z, NEG_SLOPE * z)             # bf16 LeakyReLU

    h = x_ref[...].astype(jnp.bfloat16)   # (TB, 40)
    h = layer(h, w1_ref, b1_ref)          # Conv1d(1,10,5,s=5,p=2)  -> (TB,128) [80 real]
    h = layer(h, w2_ref, b2_ref)          # Conv1d(10,20,5,s=4,p=2) -> (TB,128) [40 real]
    h = layer(h, w3_ref, b3_ref)          # Conv1d(20,30,5,s=2,p=2) -> (TB,128) [30 real]
    h = layer(h, wf1_ref, bf1_ref)        # Linear(30,10)           -> (TB,128) [10 real]

    # Linear(10,1): only one real output neuron, so compute it as a lane-dense
    # row dot(w_row, h^T) -> (8, TB) f32 (row 0 real), avoiding a 128-wide
    # padded output entirely.  dot(a, b.T) is the standard fused-transpose
    # matmul path on TPU.
    y8 = jnp.dot(wf2_ref[...], h.T, preferred_element_type=jnp.float32)  # (8, TB)
    y = y8[0:1, :] + bf2_ref[0]                                          # (1, TB)
    # Sigmoid; approx reciprocal runs on the EUP slot.
    o_ref[...] = pl.reciprocal(1.0 + jnp.exp(-y), approx=True)


# ----------------------------------------------------------------------------
# Host-side glue: lower Conv1d / Linear weights to lane-padded dense matrices
# acting on channel-major flattened activations.
# ----------------------------------------------------------------------------
def conv1d_as_matrix(w, bias, stride, pad, l_in, rows_pad, cols_pad):
    """w: (Cout, Cin, K), bias: (Cout,) ->
       (rows_pad, cols_pad) matrix for right-multiplication, (1, cols_pad) bias, l_out."""
    cout, cin, k = w.shape
    l_out = (l_in + 2 * pad - k) // stride + 1
    m = np.zeros((rows_pad, cols_pad), dtype=np.float32)
    for co in range(cout):
        for lo in range(l_out):
            for ci in range(cin):
                for kk in range(k):
                    t = lo * stride + kk - pad
                    if 0 <= t < l_in:
                        m[ci * l_in + t, co * l_out + lo] = w[co, ci, kk]
    b_p = np.zeros((1, cols_pad), dtype=np.float32)
    b_p[0, :cout * l_out] = np.repeat(np.asarray(bias, np.float32), l_out)
    return m, b_p, l_out


def fc_as_matrix(w, bias, rows_pad, cols_pad):
    """w: (out_f, in_f) PyTorch layout -> padded (rows_pad, cols_pad) + (1, cols_pad)."""
    out_f, in_f = w.shape
    m = np.zeros((rows_pad, cols_pad), dtype=np.float32)
    m[:in_f, :out_f] = np.asarray(w, np.float32).T
    b_p = np.zeros((1, cols_pad), dtype=np.float32)
    b_p[0, :out_f] = np.asarray(bias, np.float32)
    return m, b_p


def fc2_as_row(w, rows_pad, cols_pad):
    """Final Linear(10,1) weight as a lane-padded row (row 0 real, rest zero)."""
    out_f, in_f = w.shape
    assert out_f == 1
    m = np.zeros((rows_pad, cols_pad), dtype=np.float32)
    m[0, :in_f] = np.asarray(w, np.float32)[0]
    return m


def build_kernel_params(w1, b1, w2, b2, w3, b3, wf1, bf1, wf2, bf2, l_in):
    m1, bv1, l1 = conv1d_as_matrix(np.asarray(w1), np.asarray(b1), 5, 2, l_in,
                                   rows_pad=1 * l_in, cols_pad=LANE)      # (40,128)
    m2, bv2, l2 = conv1d_as_matrix(np.asarray(w2), np.asarray(b2), 4, 2, l1,
                                   rows_pad=LANE, cols_pad=LANE)          # (128,128)
    m3, bv3, l3 = conv1d_as_matrix(np.asarray(w3), np.asarray(b3), 2, 2, l2,
                                   rows_pad=LANE, cols_pad=LANE)          # (128,128)
    assert l3 == 1 and 30 * l3 == 30, "discriminator expects conv stack to end at L=1"
    mf1, bvf1 = fc_as_matrix(np.asarray(wf1), np.asarray(bf1), LANE, LANE)
    mf2 = fc2_as_row(np.asarray(wf2), 8, LANE)
    vmem_params = [
        jnp.asarray(m1, jnp.bfloat16), jnp.asarray(bv1, jnp.bfloat16),
        jnp.asarray(m2, jnp.bfloat16), jnp.asarray(bv2, jnp.bfloat16),
        jnp.asarray(m3, jnp.bfloat16), jnp.asarray(bv3, jnp.bfloat16),
        jnp.asarray(mf1, jnp.bfloat16), jnp.asarray(bvf1, jnp.bfloat16),
        jnp.asarray(mf2, jnp.bfloat16),
    ]
    bf2_scalar = jnp.asarray(np.asarray(bf2, np.float32).reshape(1), jnp.float32)
    return vmem_params, bf2_scalar


# ----------------------------------------------------------------------------
# Wrapper
# ----------------------------------------------------------------------------
def _pick_batch_tile(B, tb):
    """Batch tile: multiple of 8; single full tile only for tiny B; otherwise a
    multiple of 256 (lane-dense narrow-output blocks) no bigger than ~half the
    batch so the 'parallel' axis has >=2 steps (v7x dual TensorCore)."""
    tb = max(256, (tb // 256) * 256)
    B8 = _round_up(B, 8)
    if B8 <= 256:
        return B8
    return int(min(tb, _round_up((B + 1) // 2, 256)))


def discriminator_forward(x, kernel_params, *, tb=1024):
    # x: (B, 1, 40) float32, NCL (PyTorch layout)
    vmem_params, bf2_scalar = kernel_params
    B = x.shape[0]
    x_flat = x.reshape(B, -1).astype(jnp.float32)             # (B, 40) channel-major
    L_in = x_flat.shape[1]

    tb_eff = _pick_batch_tile(B, tb)
    B_pad = _round_up(B, tb_eff)
    if B_pad != B:
        x_flat = jnp.pad(x_flat, ((0, B_pad - B), (0, 0)))
    grid = (B_pad // tb_eff,)

    # Weights/biases are VMEM-resident: full-array blocks, constant index_map.
    w_specs = [pl.BlockSpec(p.shape, lambda i: (0, 0)) for p in vmem_params]
    smem_spec = pl.BlockSpec(memory_space=pltpu.MemorySpace.SMEM)   # fc2 bias scalar

    flops = int(2 * B_pad * (L_in * LANE + 3 * LANE * LANE + LANE * 8))
    bytes_accessed = int(B_pad * (L_in * 4 + 4) + 4 +
                         sum(int(np.prod(p.shape)) * p.dtype.itemsize
                             for p in vmem_params))

    out = pl.pallas_call(
        discriminator_kernel,
        out_shape=jax.ShapeDtypeStruct((1, B_pad), jnp.float32),
        grid=grid,
        in_specs=[pl.BlockSpec((tb_eff, L_in), lambda i: (i, 0))] + w_specs + [smem_spec],
        out_specs=pl.BlockSpec((1, tb_eff), lambda i: (0, i)),
        compiler_params=pltpu.CompilerParams(
            dimension_semantics=("parallel",)),
        cost_estimate=pl.CostEstimate(flops=flops,
                                      transcendentals=int(2 * B_pad),
                                      bytes_accessed=bytes_accessed),
    )(x_flat, *vmem_params, bf2_scalar)
    return out[0, :B].reshape(B, 1)                            # (B, 1)


# ----------------------------------------------------------------------------
# Pure-JAX reference (same semantics as the PyTorch module) for verification.
# ----------------------------------------------------------------------------
def reference_forward(x, w1, b1, w2, b2, w3, b3, wf1, bf1, wf2, bf2):
    def conv(h, w, b, stride, pad):
        y = jax.lax.conv_general_dilated(
            h, w, window_strides=(stride,), padding=[(pad, pad)],
            dimension_numbers=("NCH", "OIH", "NCH"))
        return _leaky_relu_f32(y + b[None, :, None])

    h = conv(x, w1, b1, 5, 2)
    h = conv(h, w2, b2, 4, 2)
    h = conv(h, w3, b3, 2, 2)
    h = h.reshape(h.shape[0], -1)                     # view(-1, 30*1)
    h = _leaky_relu_f32(h @ wf1.T + bf1)
    h = jax.nn.sigmoid(h @ wf2.T + bf2)
    return h


if __name__ == "__main__":
    key = jax.random.PRNGKey(0)
    ks = jax.random.split(key, 11)

    def uinit(k, shape, fan_in):
        bound = 1.0 / np.sqrt(fan_in)
        return jax.random.uniform(k, shape, jnp.float32, -bound, bound)

    B, L_IN = 2, 40   # 40 -> 8 -> 2 -> 1 : matches view(-1, 30*1)

    # Deterministic synthetic parameters (PyTorch-like uniform init).
    w1 = uinit(ks[0], (10, 1, 5), 1 * 5);    b1 = uinit(ks[1], (10,), 1 * 5)
    w2 = uinit(ks[2], (20, 10, 5), 10 * 5);  b2 = uinit(ks[3], (20,), 10 * 5)
    w3 = uinit(ks[4], (30, 20, 5), 20 * 5);  b3 = uinit(ks[5], (30,), 20 * 5)
    wf1 = uinit(ks[6], (10, 30), 30);        bf1 = uinit(ks[7], (10,), 30)
    wf2 = uinit(ks[8], (1, 10), 10);         bf2 = uinit(ks[9], (1,), 10)

    kernel_params = build_kernel_params(w1, b1, w2, b2, w3, b3,
                                        wf1, bf1, wf2, bf2, L_IN)

    x = jax.random.normal(ks[10], (B, 1, L_IN), jnp.float32)

    out = discriminator_forward(x, kernel_params)
    out = jax.block_until_ready(out)

    ref = reference_forward(x, w1, b1, w2, b2, w3, b3, wf1, bf1, wf2, bf2)
    # bf16 weights/activations (f32 MXU accumulation) + bf16 bias/LeakyReLU
    # epilogue -> loose-but-meaningful tolerance vs the f32 reference.
    np.testing.assert_allclose(np.asarray(out), np.asarray(ref),
                               rtol=3e-2, atol=3e-2)
    assert out.shape == (B, 1)
    print("KERNEL_OK")
</pallas_src>

<mosaic_0001>
module attributes {stable_mosaic.version = 11 : i64} {
  func.func @discriminator_kernel(%arg0: i32, %arg1: memref<8x40xf32, #tpu.memory_space<vmem>>, %arg2: memref<40x128xbf16, #tpu.memory_space<vmem>>, %arg3: memref<1x128xbf16, #tpu.memory_space<vmem>>, %arg4: memref<128x128xbf16, #tpu.memory_space<vmem>>, %arg5: memref<1x128xbf16, #tpu.memory_space<vmem>>, %arg6: memref<128x128xbf16, #tpu.memory_space<vmem>>, %arg7: memref<1x128xbf16, #tpu.memory_space<vmem>>, %arg8: memref<128x128xbf16, #tpu.memory_space<vmem>>, %arg9: memref<1x128xbf16, #tpu.memory_space<vmem>>, %arg10: memref<8x128xbf16, #tpu.memory_space<vmem>>, %arg11: memref<1xf32, #tpu.memory_space<smem>>, %arg12: memref<1x8xf32, #tpu.memory_space<vmem>>) attributes {dimension_semantics = [#tpu.dimension_semantics<parallel>], iteration_bounds = array<i64: 1>, scalar_prefetch = 0 : i64, scratch_operands = 0 : i64, tpu.core_type = #tpu.core_type<tc>, window_params = [{transform_indices = @transform_0, window_bounds = array<i64: 8, 40>}, {pipeline_mode = #tpu.pipeline_mode<synchronous>, transform_indices = @transform_1, window_bounds = array<i64: 40, 128>}, {pipeline_mode = #tpu.pipeline_mode<synchronous>, transform_indices = @transform_2, window_bounds = array<i64: 1, 128>}, {pipeline_mode = #tpu.pipeline_mode<synchronous>, transform_indices = @transform_3, window_bounds = array<i64: 128, 128>}, {pipeline_mode = #tpu.pipeline_mode<synchronous>, transform_indices = @transform_4, window_bounds = array<i64: 1, 128>}, {pipeline_mode = #tpu.pipeline_mode<synchronous>, transform_indices = @transform_5, window_bounds = array<i64: 128, 128>}, {pipeline_mode = #tpu.pipeline_mode<synchronous>, transform_indices = @transform_6, window_bounds = array<i64: 1, 128>}, {pipeline_mode = #tpu.pipeline_mode<synchronous>, transform_indices = @transform_7, window_bounds = array<i64: 128, 128>}, {pipeline_mode = #tpu.pipeline_mode<synchronous>, transform_indices = @transform_8, window_bounds = array<i64: 1, 128>}, {pipeline_mode = #tpu.pipeline_mode<synchronous>, transform_indices = @transform_9, window_bounds = array<i64: 8, 128>}, {transform_indices = @transform_10, window_bounds = array<i64: 1>}, {transform_indices = @transform_11, window_bounds = array<i64: 1, 8>}]} {
    %c0 = arith.constant 0 : index
    %c0_0 = arith.constant 0 : index
    %0 = vector.load %arg1[%c0, %c0_0] : memref<8x40xf32, #tpu.memory_space<vmem>>, vector<8x40xf32>
    %1 = arith.truncf %0 : vector<8x40xf32> to vector<8x40xbf16>
    %c0_1 = arith.constant 0 : index
    %c0_2 = arith.constant 0 : index
    %2 = vector.load %arg2[%c0_1, %c0_2] : memref<40x128xbf16, #tpu.memory_space<vmem>>, vector<40x128xbf16>
    %cst = arith.constant dense<0.000000e+00> : vector<8x128xf32>
    %3 = tpu.matmul %1, %2, %cst {dimension_numbers = #tpu.dot_dimension_numbers<[1], [0], [0], [1], [0, 0, 1, 1], [], []>} : vector<8x40xbf16>, vector<40x128xbf16>, vector<8x128xf32> -> vector<8x128xf32>
    %4 = arith.truncf %3 : vector<8x128xf32> to vector<8x128xbf16>
    %c0_3 = arith.constant 0 : index
    %c0_4 = arith.constant 0 : index
    %5 = vector.load %arg3[%c0_3, %c0_4] : memref<1x128xbf16, #tpu.memory_space<vmem>>, vector<1x128xbf16>
    %6 = vector.broadcast %5 : vector<1x128xbf16> to vector<8x128xbf16>
    %7 = arith.addf %4, %6 : vector<8x128xbf16>
    %cst_5 = arith.constant 1.000980e-02 : bf16
    %8 = vector.broadcast %cst_5 : bf16 to vector<8x128xbf16>
    %9 = arith.mulf %8, %7 : vector<8x128xbf16>
    %10 = arith.maximumf %7, %9 : vector<8x128xbf16>
    %c0_6 = arith.constant 0 : index
    %c0_7 = arith.constant 0 : index
    %11 = vector.load %arg4[%c0_6, %c0_7] : memref<128x128xbf16, #tpu.memory_space<vmem>>, vector<128x128xbf16>
    %cst_8 = arith.constant dense<0.000000e+00> : vector<8x128xf32>
    %12 = tpu.matmul %10, %11, %cst_8 {dimension_numbers = #tpu.dot_dimension_numbers<[1], [0], [0], [1], [0, 0, 1, 1], [], []>} : vector<8x128xbf16>, vector<128x128xbf16>, vector<8x128xf32> -> vector<8x128xf32>
    %13 = arith.truncf %12 : vector<8x128xf32> to vector<8x128xbf16>
    %c0_9 = arith.constant 0 : index
    %c0_10 = arith.constant 0 : index
    %14 = vector.load %arg5[%c0_9, %c0_10] : memref<1x128xbf16, #tpu.memory_space<vmem>>, vector<1x128xbf16>
    %15 = vector.broadcast %14 : vector<1x128xbf16> to vector<8x128xbf16>
    %16 = arith.addf %13, %15 : vector<8x128xbf16>
    %cst_11 = arith.constant 1.000980e-02 : bf16
    %17 = vector.broadcast %cst_11 : bf16 to vector<8x128xbf16>
    %18 = arith.mulf %17, %16 : vector<8x128xbf16>
    %19 = arith.maximumf %16, %18 : vector<8x128xbf16>
    %c0_12 = arith.constant 0 : index
    %c0_13 = arith.constant 0 : index
    %20 = vector.load %arg6[%c0_12, %c0_13] : memref<128x128xbf16, #tpu.memory_space<vmem>>, vector<128x128xbf16>
    %cst_14 = arith.constant dense<0.000000e+00> : vector<8x128xf32>
    %21 = tpu.matmul %19, %20, %cst_14 {dimension_numbers = #tpu.dot_dimension_numbers<[1], [0], [0], [1], [0, 0, 1, 1], [], []>} : vector<8x128xbf16>, vector<128x128xbf16>, vector<8x128xf32> -> vector<8x128xf32>
    %22 = arith.truncf %21 : vector<8x128xf32> to vector<8x128xbf16>
    %c0_15 = arith.constant 0 : index
    %c0_16 = arith.constant 0 : index
    %23 = vector.load %arg7[%c0_15, %c0_16] : memref<1x128xbf16, #tpu.memory_space<vmem>>, vector<1x128xbf16>
    %24 = vector.broadcast %23 : vector<1x128xbf16> to vector<8x128xbf16>
    %25 = arith.addf %22, %24 : vector<8x128xbf16>
    %cst_17 = arith.constant 1.000980e-02 : bf16
    %26 = vector.broadcast %cst_17 : bf16 to vector<8x128xbf16>
    %27 = arith.mulf %26, %25 : vector<8x128xbf16>
    %28 = arith.maximumf %25, %27 : vector<8x128xbf16>
    %c0_18 = arith.constant 0 : index
    %c0_19 = arith.constant 0 : index
    %29 = vector.load %arg8[%c0_18, %c0_19] : memref<128x128xbf16, #tpu.memory_space<vmem>>, vector<128x128xbf16>
    %cst_20 = arith.constant dense<0.000000e+00> : vector<8x128xf32>
    %30 = tpu.matmul %28, %29, %cst_20 {dimension_numbers = #tpu.dot_dimension_numbers<[1], [0], [0], [1], [0, 0, 1, 1], [], []>} : vector<8x128xbf16>, vector<128x128xbf16>, vector<8x128xf32> -> vector<8x128xf32>
    %31 = arith.truncf %30 : vector<8x128xf32> to vector<8x128xbf16>
    %c0_21 = arith.constant 0 : index
    %c0_22 = arith.constant 0 : index
    %32 = vector.load %arg9[%c0_21, %c0_22] : memref<1x128xbf16, #tpu.memory_space<vmem>>, vector<1x128xbf16>
    %33 = vector.broadcast %32 : vector<1x128xbf16> to vector<8x128xbf16>
    %34 = arith.addf %31, %33 : vector<8x128xbf16>
    %cst_23 = arith.constant 1.000980e-02 : bf16
    %35 = vector.broadcast %cst_23 : bf16 to vector<8x128xbf16>
    %36 = arith.mulf %35, %34 : vector<8x128xbf16>
    %37 = arith.maximumf %34, %36 : vector<8x128xbf16>
    %c0_24 = arith.constant 0 : index
    %c0_25 = arith.constant 0 : index
    %38 = vector.load %arg10[%c0_24, %c0_25] : memref<8x128xbf16, #tpu.memory_space<vmem>>, vector<8x128xbf16>
    %39 = tpu.transpose %37, [1, 0] : vector<8x128xbf16> -> vector<128x8xbf16>
    %cst_26 = arith.constant dense<0.000000e+00> : vector<8x8xf32>
    %40 = tpu.matmul %38, %39, %cst_26 {dimension_numbers = #tpu.dot_dimension_numbers<[1], [0], [0], [1], [0, 0, 1, 1], [], []>} : vector<8x128xbf16>, vector<128x8xbf16>, vector<8x8xf32> -> vector<8x8xf32>
    %41 = vector.extract_strided_slice %40 {offsets = [0, 0], sizes = [1, 8], strides = [1, 1]} : vector<8x8xf32> to vector<1x8xf32>
    %c0_27 = arith.constant 0 : index
    %42 = memref.load %arg11[%c0_27] : memref<1xf32, #tpu.memory_space<smem>>
    %43 = vector.broadcast %42 : f32 to vector<1x8xf32>
    %44 = arith.addf %41, %43 : vector<1x8xf32>
    %cst_28 = arith.constant 0.000000e+00 : f32
    %45 = vector.broadcast %cst_28 : f32 to vector<1x8xf32>
    %46 = arith.subf %45, %44 : vector<1x8xf32>
    %47 = math.exp %46 : vector<1x8xf32>
    %cst_29 = arith.constant 1.000000e+00 : f32
    %48 = vector.broadcast %cst_29 : f32 to vector<1x8xf32>
    %49 = arith.addf %48, %47 : vector<1x8xf32>
    %50 = tpu.reciprocal %49 {approx = true} : vector<1x8xf32> -> vector<1x8xf32>
    %c0_30 = arith.constant 0 : index
    %c0_31 = arith.constant 0 : index
    %51 = vector.load %arg12[%c0_30, %c0_31] : memref<1x8xf32, #tpu.memory_space<vmem>>, vector<1x8xf32>
    tpu.vector_store %arg12[%c0_30, %c0_31], %50 {strides = array<i32>} : memref<1x8xf32, #tpu.memory_space<vmem>>, vector<1x8xf32>,
    return
  }
  func.func @transform_0(%arg0: i32) -> (i32, i32) {
    %c0_i32 = arith.constant 0 : i32
    %c0_i32_0 = arith.constant 0 : i32
    return %arg0, %c0_i32 : i32, i32
  }
  func.func @transform_1(%arg0: i32) -> (i32, i32) {
    %c0_i32 = arith.constant 0 : i32
    %c0_i32_0 = arith.constant 0 : i32
    %c0_i32_1 = arith.constant 0 : i32
    return %c0_i32, %c0_i32_0 : i32, i32
  }
  func.func @transform_2(%arg0: i32) -> (i32, i32) {
    %c0_i32 = arith.constant 0 : i32
    %c0_i32_0 = arith.constant 0 : i32
    %c0_i32_1 = arith.constant 0 : i32
    return %c0_i32, %c0_i32_0 : i32, i32
  }
  func.func @transform_3(%arg0: i32) -> (i32, i32) {
    %c0_i32 = arith.constant 0 : i32
    %c0_i32_0 = arith.constant 0 : i32
    %c0_i32_1 = arith.constant 0 : i32
    return %c0_i32, %c0_i32_0 : i32, i32
  }
  func.func @transform_4(%arg0: i32) -> (i32, i32) {
    %c0_i32 = arith.constant 0 : i32
    %c0_i32_0 = arith.constant 0 : i32
    %c0_i32_1 = arith.constant 0 : i32
    return %c0_i32, %c0_i32_0 : i32, i32
  }
  func.func @transform_5(%arg0: i32) -> (i32, i32) {
    %c0_i32 = arith.constant 0 : i32
    %c0_i32_0 = arith.constant 0 : i32
    %c0_i32_1 = arith.constant 0 : i32
    return %c0_i32, %c0_i32_0 : i32, i32
  }
  func.func @transform_6(%arg0: i32) -> (i32, i32) {
    %c0_i32 = arith.constant 0 : i32
    %c0_i32_0 = arith.constant 0 : i32
    %c0_i32_1 = arith.constant 0 : i32
    return %c0_i32, %c0_i32_0 : i32, i32
  }
  func.func @transform_7(%arg0: i32) -> (i32, i32) {
    %c0_i32 = arith.constant 0 : i32
    %c0_i32_0 = arith.constant 0 : i32
    %c0_i32_1 = arith.constant 0 : i32
    return %c0_i32, %c0_i32_0 : i32, i32
  }
  func.func @transform_8(%arg0: i32) -> (i32, i32) {
    %c0_i32 = arith.constant 0 : i32
    %c0_i32_0 = arith.constant 0 : i32
    %c0_i32_1 = arith.constant 0 : i32
    return %c0_i32, %c0_i32_0 : i32, i32
  }
  func.func @transform_9(%arg0: i32) -> (i32, i32) {
    %c0_i32 = arith.constant 0 : i32
    %c0_i32_0 = arith.constant 0 : i32
    %c0_i32_1 = arith.constant 0 : i32
    return %c0_i32, %c0_i32_0 : i32, i32
  }
  func.func @transform_10(%arg0: i32) -> i32 {
    %c0_i32 = arith.constant 0 : i32
    %c0_i32_0 = arith.constant 0 : i32
    return %c0_i32 : i32
  }
  func.func @transform_11(%arg0: i32) -> (i32, i32) {
    %c0_i32 = arith.constant 0 : i32
    %c0_i32_0 = arith.constant 0 : i32
    return %c0_i32, %arg0 : i32, i32
  }
}

</mosaic_0001>

<llo_original>
// kernel: tpu_custom_call.1
$region0: #{tpu_custom_call.1}
  #allocation0 [shape = 'u32[]', space=smem, size = 0x4, offset = 0x4, fixed_abs, tag = 'smem constant byte address 0x4 - core index']
  #allocation1 [shape = 'u32[144,128]{1,0:T(1,128)}', space=vmem, size = 0x12000, scoped, tag = 'internal scratch']
  #allocation2 [shape = 'f32[1]{0:T(128)S(6)}', space=smem, size = 0x200, scoped, tag = 'scoped memory for tpu_custom_call.1']
  %s0 = inlined_call_operand.hbm [shape: f32[8,40], index: 0, kind: input, shape index: {}]
  %s1 = inlined_call_operand.hbm [shape: bf16[40,128], index: 1, kind: input, shape index: {}]
  %s2 = inlined_call_operand.vmem [shape: bf16[1,128], index: 2, kind: input, shape index: {}]
  %s3 = inlined_call_operand.hbm [shape: bf16[128,128], index: 3, kind: input, shape index: {}]
  %s4 = inlined_call_operand.vmem [shape: bf16[1,128], index: 4, kind: input, shape index: {}]
  %s5 = inlined_call_operand.hbm [shape: bf16[128,128], index: 5, kind: input, shape index: {}]
  %s6 = inlined_call_operand.vmem [shape: bf16[1,128], index: 6, kind: input, shape index: {}]
  %s7 = inlined_call_operand.hbm [shape: bf16[128,128], index: 7, kind: input, shape index: {}]
  %s8 = inlined_call_operand.vmem [shape: bf16[1,128], index: 8, kind: input, shape index: {}]
  %s9 = inlined_call_operand.vmem [shape: bf16[8,128], index: 9, kind: input, shape index: {}]
  %s10 = inlined_call_operand.<no memory space> [shape: f32[1], index: 10, kind: input, shape index: {}]
  %s11 = inlined_call_operand.hbm [shape: f32[1,8], index: 11, kind: output, shape index: {}]
  %s12 = sld [smem:[#allocation0]]
  $region74: #{tpu_custom_call.1} parent=0
    _
  %s14 = ssub.s32 1, %s12
  %s15 = scalar_select 0, %s14, %s12
  %16 = sst [smem:[#allocation2]] %s10
  $region1: #{tpu_custom_call.1} parent=0
    #allocation3 [shape = 'u8[4096]{0}', space=vmem, size = 0x1000, scoped, tag = 'input window, operand 0, single buffered']
    #allocation4 [shape = 's32[1]{0}', space=sflag, size = 0x4, scoped, tag = 'scoped memory for tpu_custom_call.1']
    #allocation5 [shape = 's32[1]{0}', space=sflag, size = 0x4, scoped, tag = 'scoped memory for tpu_custom_call.1']
    #allocation6 [shape = 'u8[10240]{0}', space=vmem, size = 0x2800, scoped, tag = 'input window, operand 1, single buffered']
    #allocation7 [shape = 's32[1]{0}', space=sflag, size = 0x4, scoped, tag = 'scoped memory for tpu_custom_call.1']
    #allocation8 [shape = 'u8[32768]{0}', space=vmem, size = 0x8000, scoped, tag = 'input window, operand 3, single buffered']
    #allocation9 [shape = 'u8[32768]{0}', space=vmem, size = 0x8000, scoped, tag = 'input window, operand 5, single buffered']
    #allocation10 [shape = 's32[1]{0}', space=sflag, size = 0x4, scoped, tag = 'scoped memory for tpu_custom_call.1']
    #allocation11 [shape = 'u8[32768]{0}', space=vmem, size = 0x8000, scoped, tag = 'input window, operand 7, single buffered']
    #allocation12 [shape = 'u8[512]{0}', space=vmem, size = 0x400, scoped, tag = 'output window, operand 0, single buffered']
    %17 = vsyncpa [#allocation4], 0
    %18 = vsyncpa [#allocation7], 0
    %19 = vsyncpa [#allocation10], 0
    %20 = vsyncpa [#allocation5], 0
    // Predicated region
    $region2: #{tpu_custom_call.1} parent=1 // pred_check
      _
    $region3: #{tpu_custom_call.1} parent=1 // pred_check_branch
      %22 = sbr.rel (0) target = $region5
    $region4: #{tpu_custom_call.1} parent=1 // pred_region
      %s24 = ssub.s32 128, 128
      %25 = vsyncadd [#allocation4], %s24
      %s27 = sshll.u32 [#allocation3], 4
      %s28 = int_to_ptr.vmem [resolvable:$true] %s27
      %30 = dma.hbm_to_vmem [thread:$0]  %s0, 128, %s28, [#allocation4]
    $region5: #{tpu_custom_call.1} parent=1 // pred_fallthru
      _
    // Predicated region
    $region6: #{tpu_custom_call.1} parent=1 // pred_check
      _
    $region7: #{tpu_custom_call.1} parent=1 // pred_check_branch
      %32 = sbr.rel (0) target = $region9
    $region8: #{tpu_custom_call.1} parent=1 // pred_region
      %s34 = ssub.s32 320, 320
      %35 = vsyncadd [#allocation7], %s34
      %s36 = sshll.u32 [#allocation6], 4
      %s37 = int_to_ptr.vmem [resolvable:$true] %s36
      %42 = dma.hbm_to_vmem [thread:$0]  %s1, 320, %s37, [#allocation7], 64, 64, 4
    $region9: #{tpu_custom_call.1} parent=1 // pred_fallthru
      _
    // Predicated region
    $region10: #{tpu_custom_call.1} parent=1 // pred_check
      _
    $region11: #{tpu_custom_call.1} parent=1 // pred_check_branch
      %44 = sbr.rel (0) target = $region13
    $region12: #{tpu_custom_call.1} parent=1 // pred_region
      _
    $region13: #{tpu_custom_call.1} parent=1 // pred_fallthru
      _
    // Predicated region
    $region14: #{tpu_custom_call.1} parent=1 // pred_check
      _
    $region15: #{tpu_custom_call.1} parent=1 // pred_check_branch
      %46 = sbr.rel (0) target = $region17
    $region16: #{tpu_custom_call.1} parent=1 // pred_region
      %s48 = ssub.s32 1024, 1024
      %49 = vsyncadd [#allocation7], %s48
      %s50 = sshll.u32 [#allocation8], 4
      %s51 = int_to_ptr.vmem [resolvable:$true] %s50
      %56 = dma.hbm_to_vmem [thread:$0]  %s3, 1024, %s51, [#allocation7], 64, 64, 4
    $region17: #{tpu_custom_call.1} parent=1 // pred_fallthru
      _
    // Predicated region
    $region18: #{tpu_custom_call.1} parent=1 // pred_check
      _
    $region19: #{tpu_custom_call.1} parent=1 // pred_check_branch
      %58 = sbr.rel (0) target = $region21
    $region20: #{tpu_custom_call.1} parent=1 // pred_region
      _
    $region21: #{tpu_custom_call.1} parent=1 // pred_fallthru
      _
    // Predicated region
    $region22: #{tpu_custom_call.1} parent=1 // pred_check
      _
    $region23: #{tpu_custom_call.1} parent=1 // pred_check_branch
      %60 = sbr.rel (0) target = $region25
    $region24: #{tpu_custom_call.1} parent=1 // pred_region
      %s62 = ssub.s32 1024, 1024
      %63 = vsyncadd [#allocation10], %s62
      %s64 = sshll.u32 [#allocation9], 4
      %s65 = int_to_ptr.vmem [resolvable:$true] %s64
      %70 = dma.hbm_to_vmem [thread:$0]  %s5, 1024, %s65, [#allocation10], 64, 64, 4
    $region25: #{tpu_custom_call.1} parent=1 // pred_fallthru
      _
    // Predicated region
    $region26: #{tpu_custom_call.1} parent=1 // pred_check
      _
    $region27: #{tpu_custom_call.1} parent=1 // pred_check_branch
      %72 = sbr.rel (0) target = $region29
    $region28: #{tpu_custom_call.1} parent=1 // pred_region
      _
    $region29: #{tpu_custom_call.1} parent=1 // pred_fallthru
      _
    // Predicated region
    $region30: #{tpu_custom_call.1} parent=1 // pred_check
      _
    $region31: #{tpu_custom_call.1} parent=1 // pred_check_branch
      %74 = sbr.rel (0) target = $region33
    $region32: #{tpu_custom_call.1} parent=1 // pred_region
      %s76 = ssub.s32 1024, 1024
      %77 = vsyncadd [#allocation10], %s76
      %s78 = sshll.u32 [#allocation11], 4
      %s79 = int_to_ptr.vmem [resolvable:$true] %s78
      %84 = dma.hbm_to_vmem [thread:$0]  %s7, 1024, %s79, [#allocation10], 64, 64, 4
    $region33: #{tpu_custom_call.1} parent=1 // pred_fallthru
      _
    // Predicated region
    $region34: #{tpu_custom_call.1} parent=1 // pred_check
      _
    $region35: #{tpu_custom_call.1} parent=1 // pred_check_branch
      %86 = sbr.rel (0) target = $region37
    $region36: #{tpu_custom_call.1} parent=1 // pred_region
      _
    $region37: #{tpu_custom_call.1} parent=1 // pred_fallthru
      _
    // Predicated region
    $region38: #{tpu_custom_call.1} parent=1 // pred_check
      _
    $region39: #{tpu_custom_call.1} parent=1 // pred_check_branch
      %88 = sbr.rel (0) target = $region41
    $region40: #{tpu_custom_call.1} parent=1 // pred_region
      _
    $region41: #{tpu_custom_call.1} parent=1 // pred_fallthru
      _
    // Predicated region
    $region42: #{tpu_custom_call.1} parent=1 // pred_check
      _
    $region43: #{tpu_custom_call.1} parent=1 // pred_check_branch
      %90 = sbr.rel (0) target = $region45
    $region44: #{tpu_custom_call.1} parent=1 // pred_region
      _
    $region45: #{tpu_custom_call.1} parent=1 // pred_fallthru
      _
    // Predicated region
    $region46: #{tpu_custom_call.1} parent=1 // pred_check
      _
    $region47: #{tpu_custom_call.1} parent=1 // pred_check_branch
      %92 = sbr.rel (0) target = $region49
    $region48: #{tpu_custom_call.1} parent=1 // pred_region
      %93 = dma.done [#allocation4], 128
    $region49: #{tpu_custom_call.1} parent=1 // pred_fallthru
      _
    // Predicated region
    $region50: #{tpu_custom_call.1} parent=1 // pred_check
      _
    $region51: #{tpu_custom_call.1} parent=1 // pred_check_branch
      %95 = sbr.rel (0) target = $region53
    $region52: #{tpu_custom_call.1} parent=1 // pred_region
      %96 = dma.done [#allocation7], 320
    $region53: #{tpu_custom_call.1} parent=1 // pred_fallthru
      _
    // Predicated region
    $region54: #{tpu_custom_call.1} parent=1 // pred_check
      _
    $region55: #{tpu_custom_call.1} parent=1 // pred_check_branch
      %98 = sbr.rel (0) target = $region57
    $region56: #{tpu_custom_call.1} parent=1 // pred_region
      %99 = dma.done [#allocation7], 1024
    $region57: #{tpu_custom_call.1} parent=1 // pred_fallthru
      _
    // Predicated region
    $region58: #{tpu_custom_call.1} parent=1 // pred_check
      _
    $region59: #{tpu_custom_call.1} parent=1 // pred_check_branch
      %101 = sbr.rel (0) target = $region61
    $region60: #{tpu_custom_call.1} parent=1 // pred_region
      %102 = dma.done [#allocation10], 1024
    $region61: #{tpu_custom_call.1} parent=1 // pred_fallthru
      _
    // Predicated region
    $region62: #{tpu_custom_call.1} parent=1 // pred_check
      _
    $region63: #{tpu_custom_call.1} parent=1 // pred_check_branch
      %104 = sbr.rel (0) target = $region65
    $region64: #{tpu_custom_call.1} parent=1 // pred_region
      %105 = dma.done [#allocation10], 1024
    $region65: #{tpu_custom_call.1} parent=1 // pred_fallthru
      _
    %v108 = vld [vmem:[#allocation3] sm:$0xff]
    %v109 = vpack.c.bf16 %v108, %v108
    %v110 = vld [vmem:[#allocation6] sm:$0xf]
    %v111 = vld [vmem:[#allocation6 + $0x4] sm:$0xf]
    %v112 = vld [vmem:[#allocation6 + $0x8] sm:$0xf]
    %v113 = vld [vmem:[#allocation6 + $0xc] sm:$0xf]
    %v114 = vld [vmem:[#allocation6 + $0x10] sm:$0xf]
    %v120 = vunpack.c.l.b16 %v110
    %v121 = vunpack.c.l.b16 %v111
    %v122 = vunpack.c.l.b16 %v112
    %v123 = vunpack.c.l.b16 %v113
    %v124 = vunpack.c.l.b16 %v114
    %v125 = vpack.c.b16 %v121, %v120
    %v126 = vpack.c.b16 %v123, %v122
    %v127 = vpack.c.b16 %v124, %v124
    %vm130 = vcmask 326656
    %v132 = vsel %vm130, %v109, 0
    %vm134 = vcmask 1043456
    %v136 = vsel %vm134, %v127, 0
    %138 = vmatprep.subr.bf16.mxu0 0
    %139 = vmatpush1.bf16.msra.mxu0 %v125
    %140 = vmatprep.subr.bf16.mxu0 0
    %141 = vmatpush1.bf16.msra.mxu0 %v126
    %142 = vmatprep.subr.bf16.mxu0 0
    %143 = vmatpush1.bf16.msra.mxu0 %v136
    %144 = vmatprep.subr.bf16.mxu0 0
    %145 = vmatpush1.bf16.msra.mxu0 0
    %146 = vmatprep.subr.bf16.mxu0 0
    %147 = vmatpush1.bf16.msra.mxu0 0
    %148 = vmatprep.subr.bf16.mxu0 0
    %149 = vmatpush1.bf16.msra.mxu0 0
    %150 = vmatprep.subr.bf16.mxu0 0
    %151 = vmatpush1.bf16.msra.mxu0 0
    %152 = vmatprep.subr.bf16.mxu0 0
    %153 = vmatpush1.bf16.msra.mxu0 0
    %154 = vmatprep.subr.bf16.mxu0 0
    %155 = vmatpush1.bf16.msra.mxu0 0
    %156 = vmatprep.subr.bf16.mxu0 0
    %157 = vmatpush1.bf16.msra.mxu0 0
    %158 = vmatprep.subr.bf16.mxu0 0
    %159 = vmatpush1.bf16.msra.mxu0 0
    %160 = vmatprep.subr.bf16.mxu0 0
    %161 = vmatpush1.bf16.msra.mxu0 0
    %162 = vmatprep.subr.bf16.mxu0 0
    %163 = vmatpush1.bf16.msra.mxu0 0
    %164 = vmatprep.subr.bf16.mxu0 0
    %165 = vmatpush1.bf16.msra.mxu0 0
    %166 = vmatprep.subr.bf16.mxu0 0
    %167 = vmatpush1.bf16.msra.mxu0 0
    %168 = vmatprep.subr.bf16.mxu0 0
    %169 = vmatpush1.bf16.msra.mxu0 0
    %170 = vmatprep.mubr.bf16.mxu0 0
    %171 = vmatmul.mubr.bf16.gmra.mrb[0].mxu0 %v132
    %v172 = vpop.f32.mrb[0].mxu0
    %v173 = vadd.f32 0.0, %v172
    %v174 = vpop.f32.mrb[0].mxu0
    %v175 = vpop.f32.mrb[0].mxu0
    %v176 = vpop.f32.mrb[0].mxu0
    %177 = vdwg.mxu0
    %v178 = vpack.c.bf16 %v173, %v173
    %v179 = vld [vmem:[%s2] sm:$0x1]
    %v181 = vpack.i.b16 %v179, %v179
    %v183 = vlaneseq
    %v184 = vshrl.u32 %v183, 7
    %v185 = vsub.s32 0, %v184
    %v186 = vrot.slane %v181, %v185
    %v187 = vadd.bf16 %v178, %v186
    %v188 = vmul.bf16 %v187, 1009007652
    %v189 = vmax.bf16 %v187, %v188
    %v190 = vld [vmem:[#allocation8] sm:$0xf]
    %v191 = vld [vmem:[#allocation8 + $0x4] sm:$0xf]
    %v192 = vld [vmem:[#allocation8 + $0x8] sm:$0xf]
    %v193 = vld [vmem:[#allocation8 + $0xc] sm:$0xf]
    %v194 = vld [vmem:[#allocation8 + $0x10] sm:$0xf]
    %v195 = vld [vmem:[#allocation8 + $0x14] sm:$0xf]
    %v196 = vld [vmem:[#allocation8 + $0x18] sm:$0xf]
    %v197 = vld [vmem:[#allocation8 + $0x1c] sm:$0xf]
    %v198 = vld [vmem:[#allocation8 + $0x20] sm:$0xf]
    %v199 = vld [vmem:[#allocation8 + $0x24] sm:$0xf]
    %v200 = vld [vmem:[#allocation8 + $0x28] sm:$0xf]
    %v201 = vld [vmem:[#allocation8 + $0x2c] sm:$0xf]
    %v202 = vld [vmem:[#allocation8 + $0x30] sm:$0xf]
    %v203 = vld [vmem:[#allocation8 + $0x34] sm:$0xf]
    %v204 = vld [vmem:[#allocation8 + $0x38] sm:$0xf]
    %v205 = vld [vmem:[#allocation8 + $0x3c] sm:$0xf]
    %v222 = vunpack.c.l.b16 %v190
    %v223 = vunpack.c.l.b16 %v191
    %v224 = vunpack.c.l.b16 %v192
    %v225 = vunpack.c.l.b16 %v193
    %v226 = vunpack.c.l.b16 %v194
    %v227 = vunpack.c.l.b16 %v195
    %v228 = vunpack.c.l.b16 %v196
    %v229 = vunpack.c.l.b16 %v197
    %v230 = vunpack.c.l.b16 %v198
    %v231 = vunpack.c.l.b16 %v199
    %v232 = vunpack.c.l.b16 %v200
    %v233 = vunpack.c.l.b16 %v201
    %v234 = vunpack.c.l.b16 %v202
    %v235 = vunpack.c.l.b16 %v203
    %v236 = vunpack.c.l.b16 %v204
    %v237 = vunpack.c.l.b16 %v205
    %v238 = vpack.c.b16 %v223, %v222
    %v239 = vpack.c.b16 %v225, %v224
    %v240 = vpack.c.b16 %v227, %v226
    %v241 = vpack.c.b16 %v229, %v228
    %v242 = vpack.c.b16 %v231, %v230
    %v243 = vpack.c.b16 %v233, %v232
    %v244 = vpack.c.b16 %v235, %v234
    %v245 = vpack.c.b16 %v237, %v236
    %254 = vmatprep.subr.bf16.mxu0 0
    %255 = vmatpush1.bf16.msra.mxu0 %v238
    %256 = vmatprep.subr.bf16.mxu0 0
    %257 = vmatpush1.bf16.msra.mxu0 %v239
    %258 = vmatprep.subr.bf16.mxu0 0
    %259 = vmatpush1.bf16.msra.mxu0 %v240
    %260 = vmatprep.subr.bf16.mxu0 0
    %261 = vmatpush1.bf16.msra.mxu0 %v241
    %262 = vmatprep.subr.bf16.mxu0 0
    %263 = vmatpush1.bf16.msra.mxu0 %v242
    %264 = vmatprep.subr.bf16.mxu0 0
    %265 = vmatpush1.bf16.msra.mxu0 %v243
    %266 = vmatprep.subr.bf16.mxu0 0
    %267 = vmatpush1.bf16.msra.mxu0 %v244
    %268 = vmatprep.subr.bf16.mxu0 0
    %269 = vmatpush1.bf16.msra.mxu0 %v245
    %270 = vmatprep.subr.bf16.mxu0 0
    %271 = vmatpush1.bf16.msra.mxu0 0
    %272 = vmatprep.subr.bf16.mxu0 0
    %273 = vmatpush1.bf16.msra.mxu0 0
    %274 = vmatprep.subr.bf16.mxu0 0
    %275 = vmatpush1.bf16.msra.mxu0 0
    %276 = vmatprep.subr.bf16.mxu0 0
    %277 = vmatpush1.bf16.msra.mxu0 0
    %278 = vmatprep.subr.bf16.mxu0 0
    %279 = vmatpush1.bf16.msra.mxu0 0
    %280 = vmatprep.subr.bf16.mxu0 0
    %281 = vmatpush1.bf16.msra.mxu0 0
    %282 = vmatprep.subr.bf16.mxu0 0
    %283 = vmatpush1.bf16.msra.mxu0 0
    %284 = vmatprep.subr.bf16.mxu0 0
    %285 = vmatpush1.bf16.msra.mxu0 0
    %286 = vmatprep.mubr.bf16.mxu0 0
    %287 = vmatmul.mubr.bf16.gmra.mrb[0].mxu0 %v189
    %v288 = vpop.f32.mrb[0].mxu0
    %v289 = vadd.f32 0.0, %v288
    %v290 = vpop.f32.mrb[0].mxu0
    %v291 = vpop.f32.mrb[0].mxu0
    %v292 = vpop.f32.mrb[0].mxu0
    %293 = vdwg.mxu0
    %v294 = vpack.c.bf16 %v289, %v289
    %v295 = vld [vmem:[%s4] sm:$0x1]
    %v297 = vpack.i.b16 %v295, %v295
    %v299 = vlaneseq
    %v300 = vshrl.u32 %v299, 7
    %v301 = vsub.s32 0, %v300
    %v302 = vrot.slane %v297, %v301
    %v303 = vadd.bf16 %v294, %v302
    %v304 = vmul.bf16 %v303, 1009007652
    %v305 = vmax.bf16 %v303, %v304
    %v306 = vld [vmem:[#allocation9] sm:$0xf]
    %v307 = vld [vmem:[#allocation9 + $0x4] sm:$0xf]
    %v308 = vld [vmem:[#allocation9 + $0x8] sm:$0xf]
    %v309 = vld [vmem:[#allocation9 + $0xc] sm:$0xf]
    %v310 = vld [vmem:[#allocation9 + $0x10] sm:$0xf]
    %v311 = vld [vmem:[#allocation9 + $0x14] sm:$0xf]
    %v312 = vld [vmem:[#allocation9 + $0x18] sm:$0xf]
    %v313 = vld [vmem:[#allocation9 + $0x1c] sm:$0xf]
    %v314 = vld [vmem:[#allocation9 + $0x20] sm:$0xf]
    %v315 = vld [vmem:[#allocation9 + $0x24] sm:$0xf]
    %v316 = vld [vmem:[#allocation9 + $0x28] sm:$0xf]
    %v317 = vld [vmem:[#allocation9 + $0x2c] sm:$0xf]
    %v318 = vld [vmem:[#allocation9 + $0x30] sm:$0xf]
    %v319 = vld [vmem:[#allocation9 + $0x34] sm:$0xf]
    %v320 = vld [vmem:[#allocation9 + $0x38] sm:$0xf]
    %v321 = vld [vmem:[#allocation9 + $0x3c] sm:$0xf]
    %v338 = vunpack.c.l.b16 %v306
    %v339 = vunpack.c.l.b16 %v307
    %v340 = vunpack.c.l.b16 %v308
    %v341 = vunpack.c.l.b16 %v309
    %v342 = vunpack.c.l.b16 %v310
    %v343 = vunpack.c.l.b16 %v311
    %v344 = vunpack.c.l.b16 %v312
    %v345 = vunpack.c.l.b16 %v313
    %v346 = vunpack.c.l.b16 %v314
    %v347 = vunpack.c.l.b16 %v315
    %v348 = vunpack.c.l.b16 %v316
    %v349 = vunpack.c.l.b16 %v317
    %v350 = vunpack.c.l.b16 %v318
    %v351 = vunpack.c.l.b16 %v319
    %v352 = vunpack.c.l.b16 %v320
    %v353 = vunpack.c.l.b16 %v321
    %v354 = vpack.c.b16 %v339, %v338
    %v355 = vpack.c.b16 %v341, %v340
    %v356 = vpack.c.b16 %v343, %v342
    %v357 = vpack.c.b16 %v345, %v344
    %v358 = vpack.c.b16 %v347, %v346
    %v359 = vpack.c.b16 %v349, %v348
    %v360 = vpack.c.b16 %v351, %v350
    %v361 = vpack.c.b16 %v353, %v352
    %370 = vmatprep.subr.bf16.mxu0 0
    %371 = vmatpush1.bf16.msra.mxu0 %v354
    %372 = vmatprep.subr.bf16.mxu0 0
    %373 = vmatpush1.bf16.msra.mxu0 %v355
    %374 = vmatprep.subr.bf16.mxu0 0
    %375 = vmatpush1.bf16.msra.mxu0 %v356
    %376 = vmatprep.subr.bf16.mxu0 0
    %377 = vmatpush1.bf16.msra.mxu0 %v357
    %378 = vmatprep.subr.bf16.mxu0 0
    %379 = vmatpush1.bf16.msra.mxu0 %v358
    %380 = vmatprep.subr.bf16.mxu0 0
    %381 = vmatpush1.bf16.msra.mxu0 %v359
    %382 = vmatprep.subr.bf16.mxu0 0
    %383 = vmatpush1.bf16.msra.mxu0 %v360
    %384 = vmatprep.subr.bf16.mxu0 0
    %385 = vmatpush1.bf16.msra.mxu0 %v361
    %386 = vmatprep.subr.bf16.mxu0 0
    %387 = vmatpush1.bf16.msra.mxu0 0
    %388 = vmatprep.subr.bf16.mxu0 0
    %389 = vmatpush1.bf16.msra.mxu0 0
    %390 = vmatprep.subr.bf16.mxu0 0
    %391 = vmatpush1.bf16.msra.mxu0 0
    %392 = vmatprep.subr.bf16.mxu0 0
    %393 = vmatpush1.bf16.msra.mxu0 0
    %394 = vmatprep.subr.bf16.mxu0 0
    %395 = vmatpush1.bf16.msra.mxu0 0
    %396 = vmatprep.subr.bf16.mxu0 0
    %397 = vmatpush1.bf16.msra.mxu0 0
    %398 = vmatprep.subr.bf16.mxu0 0
    %399 = vmatpush1.bf16.msra.mxu0 0
    %400 = vmatprep.subr.bf16.mxu0 0
    %401 = vmatpush1.bf16.msra.mxu0 0
    %402 = vmatprep.mubr.bf16.mxu0 0
    %403 = vmatmul.mubr.bf16.gmra.mrb[0].mxu0 %v305
    %v404 = vpop.f32.mrb[0].mxu0
    %v405 = vadd.f32 0.0, %v404
    %v406 = vpop.f32.mrb[0].mxu0
    %v407 = vpop.f32.mrb[0].mxu0
    %v408 = vpop.f32.mrb[0].mxu0
    %409 = vdwg.mxu0
    %v410 = vpack.c.bf16 %v405, %v405
    %v411 = vld [vmem:[%s6] sm:$0x1]
    %v413 = vpack.i.b16 %v411, %v411
    %v415 = vlaneseq
    %v416 = vshrl.u32 %v415, 7
    %v417 = vsub.s32 0, %v416
    %v418 = vrot.slane %v413, %v417
    %v419 = vadd.bf16 %v410, %v418
    %v420 = vmul.bf16 %v419, 1009007652
    %v421 = vmax.bf16 %v419, %v420
    %v422 = vld [vmem:[#allocation11] sm:$0xf]
    %v423 = vld [vmem:[#allocation11 + $0x4] sm:$0xf]
    %v424 = vld [vmem:[#allocation11 + $0x8] sm:$0xf]
    %v425 = vld [vmem:[#allocation11 + $0xc] sm:$0xf]
    %v426 = vld [vmem:[#allocation11 + $0x10] sm:$0xf]
    %v427 = vld [vmem:[#allocation11 + $0x14] sm:$0xf]
    %v428 = vld [vmem:[#allocation11 + $0x18] sm:$0xf]
    %v429 = vld [vmem:[#allocation11 + $0x1c] sm:$0xf]
    %v430 = vld [vmem:[#allocation11 + $0x20] sm:$0xf]
    %v431 = vld [vmem:[#allocation11 + $0x24] sm:$0xf]
    %v432 = vld [vmem:[#allocation11 + $0x28] sm:$0xf]
    %v433 = vld [vmem:[#allocation11 + $0x2c] sm:$0xf]
    %v434 = vld [vmem:[#allocation11 + $0x30] sm:$0xf]
    %v435 = vld [vmem:[#allocation11 + $0x34] sm:$0xf]
    %v436 = vld [vmem:[#allocation11 + $0x38] sm:$0xf]
    %v437 = vld [vmem:[#allocation11 + $0x3c] sm:$0xf]
    %v454 = vunpack.c.l.b16 %v422
    %v455 = vunpack.c.l.b16 %v423
    %v456 = vunpack.c.l.b16 %v424
    %v457 = vunpack.c.l.b16 %v425
    %v458 = vunpack.c.l.b16 %v426
    %v459 = vunpack.c.l.b16 %v427
    %v460 = vunpack.c.l.b16 %v428
    %v461 = vunpack.c.l.b16 %v429
    %v462 = vunpack.c.l.b16 %v430
    %v463 = vunpack.c.l.b16 %v431
    %v464 = vunpack.c.l.b16 %v432
    %v465 = vunpack.c.l.b16 %v433
    %v466 = vunpack.c.l.b16 %v434
    %v467 = vunpack.c.l.b16 %v435
    %v468 = vunpack.c.l.b16 %v436
    %v469 = vunpack.c.l.b16 %v437
    %v470 = vpack.c.b16 %v455, %v454
    %v471 = vpack.c.b16 %v457, %v456
    %v472 = vpack.c.b16 %v459, %v458
    %v473 = vpack.c.b16 %v461, %v460
    %v474 = vpack.c.b16 %v463, %v462
    %v475 = vpack.c.b16 %v465, %v464
    %v476 = vpack.c.b16 %v467, %v466
    %v477 = vpack.c.b16 %v469, %v468
    %486 = vmatprep.subr.bf16.mxu0 0
    %487 = vmatpush1.bf16.msra.mxu0 %v470
    %488 = vmatprep.subr.bf16.mxu0 0
    %489 = vmatpush1.bf16.msra.mxu0 %v471
    %490 = vmatprep.subr.bf16.mxu0 0
    %491 = vmatpush1.bf16.msra.mxu0 %v472
    %492 = vmatprep.subr.bf16.mxu0 0
    %493 = vmatpush1.bf16.msra.mxu0 %v473
    %494 = vmatprep.subr.bf16.mxu0 0
    %495 = vmatpush1.bf16.msra.mxu0 %v474
    %496 = vmatprep.subr.bf16.mxu0 0
    %497 = vmatpush1.bf16.msra.mxu0 %v475
    %498 = vmatprep.subr.bf16.mxu0 0
    %499 = vmatpush1.bf16.msra.mxu0 %v476
    %500 = vmatprep.subr.bf16.mxu0 0
    %501 = vmatpush1.bf16.msra.mxu0 %v477
    %502 = vmatprep.subr.bf16.mxu0 0
    %503 = vmatpush1.bf16.msra.mxu0 0
    %504 = vmatprep.subr.bf16.mxu0 0
    %505 = vmatpush1.bf16.msra.mxu0 0
    %506 = vmatprep.subr.bf16.mxu0 0
    %507 = vmatpush1.bf16.msra.mxu0 0
    %508 = vmatprep.subr.bf16.mxu0 0
    %509 = vmatpush1.bf16.msra.mxu0 0
    %510 = vmatprep.subr.bf16.mxu0 0
    %511 = vmatpush1.bf16.msra.mxu0 0
    %512 = vmatprep.subr.bf16.mxu0 0
    %513 = vmatpush1.bf16.msra.mxu0 0
    %514 = vmatprep.subr.bf16.mxu0 0
    %515 = vmatpush1.bf16.msra.mxu0 0
    %516 = vmatprep.subr.bf16.mxu0 0
    %517 = vmatpush1.bf16.msra.mxu0 0
    %518 = vmatprep.mubr.bf16.mxu0 0
    %519 = vmatmul.mubr.bf16.gmra.mrb[0].mxu0 %v421
    %v520 = vpop.f32.mrb[0].mxu0
    %v521 = vadd.f32 0.0, %v520
    %v522 = vpop.f32.mrb[0].mxu0
    %v523 = vpop.f32.mrb[0].mxu0
    %v524 = vpop.f32.mrb[0].mxu0
    %525 = vdwg.mxu0
    %v526 = vpack.c.bf16 %v521, %v521
    %v527 = vld [vmem:[%s8] sm:$0x1]
    %v529 = vpack.i.b16 %v527, %v527
    %v531 = vlaneseq
    %v532 = vshrl.u32 %v531, 7
    %v533 = vsub.s32 0, %v532
    %v534 = vrot.slane %v529, %v533
    %v535 = vadd.bf16 %v526, %v534
    %v536 = vmul.bf16 %v535, 1009007652
    %v537 = vmax.bf16 %v535, %v536
    %v538 = vld [vmem:[%s9] sm:$0xf]
    %539 = vmatprep.subr.bf16.mxu0 0
    %540 = vmatpush1.bf16.xpose.msra.mxu0 %v537
    %541 = vmatprep.subr.bf16.mxu0 0
    %542 = vmatpush1.bf16.xpose.msra.mxu0 0
    %543 = vmatprep.subr.bf16.mxu0 0
    %544 = vmatpush1.bf16.xpose.msra.mxu0 0
    %545 = vmatprep.subr.bf16.mxu0 0
    %546 = vmatpush1.bf16.xpose.msra.mxu0 0
    %547 = vmatprep.subr.bf16.mxu0 0
    %548 = vmatpush1.bf16.xpose.msra.mxu0 0
    %549 = vmatprep.subr.bf16.mxu0 0
    %550 = vmatpush1.bf16.xpose.msra.mxu0 0
    %551 = vmatprep.subr.bf16.mxu0 0
    %552 = vmatpush1.bf16.xpose.msra.mxu0 0
    %553 = vmatprep.subr.bf16.mxu0 0
    %554 = vmatpush1.bf16.xpose.msra.mxu0 0
    %555 = vmatprep.subr.bf16.mxu0 0
    %556 = vmatpush1.bf16.xpose.msra.mxu0 0
    %557 = vmatprep.subr.bf16.mxu0 0
    %558 = vmatpush1.bf16.xpose.msra.mxu0 0
    %559 = vmatprep.subr.bf16.mxu0 0
    %560 = vmatpush1.bf16.xpose.msra.mxu0 0
    %561 = vmatprep.subr.bf16.mxu0 0
    %562 = vmatpush1.bf16.xpose.msra.mxu0 0
    %563 = vmatprep.subr.bf16.mxu0 0
    %564 = vmatpush1.bf16.xpose.msra.mxu0 0
    %565 = vmatprep.subr.bf16.mxu0 0
    %566 = vmatpush1.bf16.xpose.msra.mxu0 0
    %567 = vmatprep.subr.bf16.mxu0 0
    %568 = vmatpush1.bf16.xpose.msra.mxu0 0
    %569 = vmatprep.subr.bf16.mxu0 0
    %570 = vmatpush1.bf16.xpose.msra.mxu0 0
    %571 = vmatprep.mubr.bf16.mxu0 0
    %572 = vmatmul.mubr.bf16.gmra.mrb[0].mxu0 %v538
    %v573 = vpop.f32.mrb[0].mxu0
    %v574 = vadd.f32 0.0, %v573
    %v575 = vpop.f32.mrb[0].mxu0
    %v576 = vpop.f32.mrb[0].mxu0
    %v577 = vpop.f32.mrb[0].mxu0
    %578 = vdwg.mxu0
    %s579 = sld [smem:[#allocation2]]
    %v580 = vstv %s579
    %v581 = vadd.f32 %v574, %v580
    %v582 = vsub.f32 0.0, %v581
    %v583 = vmul.f32 %v582, 1.442695
    %v584 = vpow.pop %v583
    %v585 = vadd.f32 %v584, 1.0
    %v586 = vrcp.pop %v585
    %vm587 = vcmask 57344
    %588 = vst.msk [vmem:[#allocation12] sm:$0x1] %vm587, %v586
    // Predicated region
    $region66: #{tpu_custom_call.1} parent=1 // pred_check
      _
    $region67: #{tpu_custom_call.1} parent=1 // pred_check_branch
      %590 = sbr.rel (0) target = $region69
    $region68: #{tpu_custom_call.1} parent=1 // pred_region
      %s592 = ssub.s32 16, 16
      %593 = vsyncadd [#allocation5], %s592
      %s595 = sshll.u32 [#allocation12], 4
      %s596 = int_to_ptr.vmem [resolvable:$true] %s595
      %598 = dma.vmem_to_hbm [thread:$0]  %s596, 16, %s11, [#allocation5]
    $region69: #{tpu_custom_call.1} parent=1 // pred_fallthru
      _
    // Predicated region
    $region70: #{tpu_custom_call.1} parent=1 // pred_check
      _
    $region71: #{tpu_custom_call.1} parent=1 // pred_check_branch
      %600 = sbr.rel (0) target = $region73
    $region72: #{tpu_custom_call.1} parent=1 // pred_region
      %601 = dma.done [#allocation5], 16
    $region73: #{tpu_custom_call.1} parent=1 // pred_fallthru
      _
    %602 = vsyncpa [#allocation4], 1
    %603 = vsyncpa [#allocation7], 1
    %604 = vsyncpa [#allocation10], 1
    %605 = vsyncpa [#allocation5], 1

</llo_original>
